<compile_context>
chip_gen: v6e
topology: v6e:2x2x1
jax: 0.10.0
libtpu: 0.0.40
codegen_flags: <defaults>
</compile_context>

<pallas_src>
import jax
import jax.numpy as jnp
from jax.experimental import pallas as pl
from jax.experimental.pallas import tpu as pltpu


_BLOCK_ROWS = 512                      # multiple of 8/16/32 -> fine for f32/bf16/int8
_LANE_CHOICES = (1024, 512, 256, 128)  # keeps a block <= 512*1024 elems (2 MiB f32)
_FAST_PATH_MAX = _BLOCK_ROWS * 1024    # <= one block -> grid-free dispatch


def _sign_kernel(x_ref, o_ref):
    x = x_ref[...]
    one = jnp.ones_like(x)
    o_ref[...] = jnp.where(x >= 0, one, -one)


def _cost(n, itemsize):
    return pl.CostEstimate(flops=n, transcendentals=0, bytes_accessed=2 * n * itemsize)


def bnn_sign(x):
    """Elementwise BNN sign: +1 for x >= 0, -1 for x < 0. Any shape / float dtype."""
    orig_shape = x.shape
    dtype = x.dtype
    flat = x.reshape(-1)
    n = flat.shape[0]
    if n == 0:
        return x

    itemsize = jnp.dtype(dtype).itemsize

    # ---- fast path: whole array fits comfortably in one block ----------------
    if n <= _FAST_PATH_MAX:
        if n % 128 == 0:
            rows, lanes = n // 128, 128   # lane-dense 2D slab
        else:
            rows, lanes = 1, n            # tiny/odd sizes: single row
        out2d = pl.pallas_call(
            _sign_kernel,
            out_shape=jax.ShapeDtypeStruct((rows, lanes), dtype),
            cost_estimate=_cost(n, itemsize),
        )(flat.reshape(rows, lanes))
        return out2d.reshape(orig_shape)

    # ---- main path: large lane-dense blocks; ragged edge masked by Pallas ----
    lanes = next((l for l in _LANE_CHOICES if n % l == 0), None)
    padded = False
    if lanes is None:
        # Rare: flattened size is not a multiple of 128. Pad once (copies input).
        # TODO(synk): handle the <128-element tail with a separate tiny kernel to
        # avoid the pad/slice copies entirely.
        lanes = 128
        n_pad = pl.cdiv(n, lanes) * lanes
        flat = jnp.concatenate([flat, jnp.zeros((n_pad - n,), dtype)])
        padded = True
    else:
        n_pad = n

    rows = n_pad // lanes                    # > _BLOCK_ROWS here by construction
    x2d = flat.reshape(rows, lanes)
    grid = (pl.cdiv(rows, _BLOCK_ROWS),)     # edge block (if any) is OOB-masked

    out2d = pl.pallas_call(
        _sign_kernel,
        out_shape=jax.ShapeDtypeStruct((rows, lanes), dtype),
        grid=grid,
        in_specs=[pl.BlockSpec((_BLOCK_ROWS, lanes), lambda i: (i, 0))],
        out_specs=pl.BlockSpec((_BLOCK_ROWS, lanes), lambda i: (i, 0)),
        compiler_params=pltpu.CompilerParams(
            dimension_semantics=("parallel",),   # shard grid across v7x's 2 TCs
        ),
        cost_estimate=_cost(n_pad, itemsize),
    )(x2d)

    out_flat = out2d.reshape(-1)
    if padded:
        out_flat = out_flat[:n]
    return out_flat.reshape(orig_shape)


class SignBNN:
    """JAX/Pallas port of the PyTorch SignBNN module (forward pass)."""

    def __init__(self, override="matt"):
        self.override = override

    def __call__(self, x):
        if self.override == "matt":
            return bnn_sign(x)
        elif self.override == "pass":
            # Forward is identical; only the gradient (straight-through) differs.
            # TODO(synk): custom_vjp with straight-through backward for 'pass'.
            return bnn_sign(x)
        raise ValueError(f"unknown override: {self.override!r}")


if __name__ == "__main__":
    key = jax.random.PRNGKey(0)
    mod = SignBNN(override="matt")

    # 1) Small NCHW input (batch=2, channels=4, spatial=16x16) -> fast path.
    x_small = jax.random.normal(key, (2, 4, 16, 16), dtype=jnp.float32)
    y_small = jax.block_until_ready(mod(x_small))
    ref_small = jnp.where(x_small >= 0, jnp.float32(1.0), jnp.float32(-1.0))
    assert y_small.shape == x_small.shape and y_small.dtype == x_small.dtype
    assert bool(jnp.all(y_small == ref_small))

    # 2) Larger input to exercise the tiled (gridded) path as well.
    x_big = jax.random.normal(key, (8, 64, 32, 64), dtype=jnp.float32)  # 1M elems
    y_big = jax.block_until_ready(mod(x_big))
    ref_big = jnp.where(x_big >= 0, jnp.float32(1.0), jnp.float32(-1.0))
    assert y_big.shape == x_big.shape and y_big.dtype == x_big.dtype
    assert bool(jnp.all(y_big == ref_big))

    print("KERNEL_OK")
</pallas_src>

<mosaic_0001>
module attributes {stable_mosaic.version = 11 : i64} {
  func.func @_sign_kernel(%arg0: memref<16x128xf32, #tpu.memory_space<vmem>>, %arg1: memref<16x128xf32, #tpu.memory_space<vmem>>) attributes {dimension_semantics = [], scalar_prefetch = 0 : i64, scratch_operands = 0 : i64, tpu.core_type = #tpu.core_type<tc>} {
    %c0 = arith.constant 0 : index
    %c0_0 = arith.constant 0 : index
    %0 = vector.load %arg0[%c0, %c0_0] : memref<16x128xf32, #tpu.memory_space<vmem>>, vector<16x128xf32>
    %cst = arith.constant 1.000000e+00 : f32
    %1 = vector.broadcast %cst : f32 to vector<16x128xf32>
    %cst_1 = arith.constant 0.000000e+00 : f32
    %2 = vector.broadcast %cst_1 : f32 to vector<16x128xf32>
    %3 = arith.cmpf oge, %0, %2 : vector<16x128xf32>
    %cst_2 = arith.constant 0.000000e+00 : f32
    %4 = vector.broadcast %cst_2 : f32 to vector<16x128xf32>
    %5 = arith.subf %4, %1 : vector<16x128xf32>
    %6 = arith.select %3, %1, %5 : vector<16x128xi1>, vector<16x128xf32>
    %c0_3 = arith.constant 0 : index
    %c0_4 = arith.constant 0 : index
    %7 = vector.load %arg1[%c0_3, %c0_4] : memref<16x128xf32, #tpu.memory_space<vmem>>, vector<16x128xf32>
    tpu.vector_store %arg1[%c0_3, %c0_4], %6 {strides = array<i32>} : memref<16x128xf32, #tpu.memory_space<vmem>>, vector<16x128xf32>,
    return
  }
}

</mosaic_0001>

<llo_original>
// kernel: tpu_custom_call.1
$region0: #{tpu_custom_call.1}
  #allocation0 [shape = 'u32[]', space=smem, size = 0x4, offset = 0x4, fixed_abs, tag = 'smem constant byte address 0x4 - core index']
  #allocation1 [shape = 'u32[144,128]{1,0:T(1,128)}', space=vmem, size = 0x12000, scoped, tag = 'internal scratch']
  %s0 = inlined_call_operand.hbm [shape: f32[16,128], index: 0, kind: input, shape index: {}]
  %s1 = inlined_call_operand.hbm [shape: f32[16,128], index: 1, kind: output, shape index: {}]
  %s2 = sld [smem:[#allocation0]]
  $region18: #{tpu_custom_call.1} parent=0
    _
  %s4 = ssub.s32 1, %s2
  %s5 = scalar_select 0, %s4, %s2
  $region1: #{tpu_custom_call.1} parent=0
    #allocation2 [shape = 'u8[8192]{0}', space=vmem, size = 0x2000, scoped, tag = 'input window, operand 0, single buffered']
    #allocation3 [shape = 's32[1]{0}', space=sflag, size = 0x4, scoped, tag = 'scoped memory for tpu_custom_call.1']
    #allocation4 [shape = 's32[1]{0}', space=sflag, size = 0x4, scoped, tag = 'scoped memory for tpu_custom_call.1']
    #allocation5 [shape = 'u8[8192]{0}', space=vmem, size = 0x2000, scoped, tag = 'output window, operand 0, single buffered']
    %6 = vsyncpa [#allocation3], 0
    %7 = vsyncpa [#allocation4], 0
    // Predicated region
    $region2: #{tpu_custom_call.1} parent=1 // pred_check
      _
    $region3: #{tpu_custom_call.1} parent=1 // pred_check_branch
      %9 = sbr.rel (0) target = $region5
    $region4: #{tpu_custom_call.1} parent=1 // pred_region
      %s11 = ssub.s32 256, 256
      %12 = vsyncadd [#allocation3], %s11
      %s13 = sshll.u32 [#allocation2], 4
      %s14 = int_to_ptr.vmem [resolvable:$true] %s13
      %19 = dma.hbm_to_vmem [thread:$0]  %s0, 256, %s14, [#allocation3], 128, 128, 8
    $region5: #{tpu_custom_call.1} parent=1 // pred_fallthru
      _
    // Predicated region
    $region6: #{tpu_custom_call.1} parent=1 // pred_check
      _
    $region7: #{tpu_custom_call.1} parent=1 // pred_check_branch
      %21 = sbr.rel (0) target = $region9
    $region8: #{tpu_custom_call.1} parent=1 // pred_region
      %22 = dma.done [#allocation3], 256
    $region9: #{tpu_custom_call.1} parent=1 // pred_fallthru
      _
    %v23 = vld [vmem:[#allocation2] sm:$0xff]
    %v24 = vld [vmem:[#allocation2 + $0x8] sm:$0xff]
    %vm25 = vcmp.ge.f32.partialorder %v23, 0.0
    %vm26 = vcmp.ge.f32.partialorder %v24, 0.0
    %v27 = vsel %vm25, 1.0, -1.0
    %v28 = vsel %vm26, 1.0, -1.0
    %29 = vst [vmem:[#allocation5] sm:$0xff] %v27
    %30 = vst [vmem:[#allocation5 + $0x8] sm:$0xff] %v28
    // Predicated region
    $region10: #{tpu_custom_call.1} parent=1 // pred_check
      _
    $region11: #{tpu_custom_call.1} parent=1 // pred_check_branch
      %32 = sbr.rel (0) target = $region13
    $region12: #{tpu_custom_call.1} parent=1 // pred_region
      %s34 = ssub.s32 256, 256
      %35 = vsyncadd [#allocation4], %s34
      %s36 = sshll.u32 [#allocation5], 4
      %s37 = int_to_ptr.vmem [resolvable:$true] %s36
      %42 = dma.vmem_to_hbm [thread:$0]  %s37, 256, %s1, [#allocation4], 128, 128, 8
    $region13: #{tpu_custom_call.1} parent=1 // pred_fallthru
      _
    // Predicated region
    $region14: #{tpu_custom_call.1} parent=1 // pred_check
      _
    $region15: #{tpu_custom_call.1} parent=1 // pred_check_branch
      %44 = sbr.rel (0) target = $region17
    $region16: #{tpu_custom_call.1} parent=1 // pred_region
      %45 = dma.done [#allocation4], 256
    $region17: #{tpu_custom_call.1} parent=1 // pred_fallthru
      _
    %46 = vsyncpa [#allocation3], 1
    %47 = vsyncpa [#allocation4], 1

</llo_original>
